<compile_context>
chip_gen: v5e
topology: v5e:2x2
jax: 0.10.0
libtpu: 0.0.40
codegen_flags: <defaults>
</compile_context>

<pallas_src>
import jax
import jax.numpy as jnp
from jax import lax
from jax.experimental import pallas as pl
from jax.experimental.pallas import tpu as pltpu

EMB_SIZE = 50  # emb_size from the reference script


def pooled_score_kernel(tok_ref, len_ref, scores_ref, bias_ref, out_ref):
    """Fused (folded) embedding-score gather + length-normalized pool + bias.

    tok_ref   : VMEM (S, TB)  int32   -- token ids, batch on lanes
    len_ref   : VMEM (1, TB)  float32 -- per-row sequence lengths (padded rows = 1.0)
    scores_ref: VMEM (VP, 1)  float32 -- emb_table @ w, vocab on sublanes (zero padded)
    bias_ref  : SMEM (1, 1)   float32 -- linear bias
    out_ref   : VMEM (1, TB)  float32 -- lane-dense predictions for this batch tile
    """
    S, TB = tok_ref.shape
    VP = scores_ref.shape[0]

    # Vocab index along sublanes, replicated across the batch lanes (hoisted).
    iota_v = lax.broadcasted_iota(jnp.int32, (VP, TB), 0)

    def s_body(s, counts):
        tok_row = tok_ref[pl.ds(s, 1), :]                       # (1, TB) dynamic sublane slice
        return counts + jnp.where(tok_row == iota_v, 1.0, 0.0)  # VPU compare + add

    counts = lax.fori_loop(0, S, s_body,
                           jnp.zeros((VP, TB), jnp.float32), unroll=True)

    # pooled[b] = sum_v counts[v, b] * scores[v]   (VPU mul + XLU sublane reduce)
    pooled = jnp.sum(counts * scores_ref[...], axis=0, keepdims=True)   # (1, TB)

    # One exact reciprocal per tile (hoisted), then a single fused multiply-add.
    inv_len = pl.reciprocal(len_ref[...], approx=False)                 # (1, TB)
    out_ref[...] = pooled * inv_len + bias_ref[0, 0]


def module1_forward(x_tokens, lengths, emb_table, w, b, *, batch_tile=128):
    """x_tokens: (B, S) int; lengths: (B,); emb_table: (V, E); w: (E, 1); b: (1,).
    Returns (B, 1) float32 with the same semantics as Module1.forward."""
    B, S = x_tokens.shape
    V, E = emb_table.shape

    # Fold the Linear weight into the table (exact by linearity): scores[v] = emb[v] . w
    scores = emb_table.astype(jnp.float32) @ w.astype(jnp.float32).reshape(E, 1)  # (V, 1)
    VP = ((V + 7) // 8) * 8                       # sublane-pad the vocab axis
    scores_col = jnp.pad(scores, ((0, VP - V), (0, 0)))                           # (VP, 1)

    TB = batch_tile                               # lane-dense batch tile (multiple of 128)
    B_pad = ((B + TB - 1) // TB) * TB

    # Batch goes on the lane axis everywhere: tokens (S, B_pad), lengths/out (1, B_pad).
    tok_t = jnp.pad(x_tokens.astype(jnp.int32), ((0, B_pad - B), (0, 0))).T       # (S, B_pad)
    len_row = jnp.pad(lengths.astype(jnp.float32), (0, B_pad - B),
                      constant_values=1.0).reshape(1, B_pad)                      # no div-by-0
    bias = b.astype(jnp.float32).reshape(1, 1)                                    # -> SMEM

    # TODO(synk): for very large vocabularies, replace the whole-vocab one-hot counts
    # with a scalar-prefetch-driven row gather (pl.Element / manual DMA) on scores.

    out_row = pl.pallas_call(
        pooled_score_kernel,
        out_shape=jax.ShapeDtypeStruct((1, B_pad), jnp.float32),
        grid_spec=pltpu.PrefetchScalarGridSpec(
            num_scalar_prefetch=0,
            grid=(B_pad // TB,),
            in_specs=[
                pl.BlockSpec((S, TB), lambda i: (0, i)),      # token ids (batch tile)
                pl.BlockSpec((1, TB), lambda i: (0, i)),      # lengths   (batch tile)
                pl.BlockSpec((VP, 1), lambda i: (0, 0)),      # folded scores (resident)
                pl.BlockSpec(memory_space=pltpu.MemorySpace.SMEM),  # bias scalar
            ],
            out_specs=pl.BlockSpec((1, TB), lambda i: (0, i)),
        ),
        compiler_params=pltpu.CompilerParams(
            dimension_semantics=("parallel",)),   # batch tiles shard across TCs (v7x)
    )(tok_t, len_row, scores_col, bias)

    return out_row[0, :B].reshape(B, 1)


if __name__ == "__main__":
    key = jax.random.PRNGKey(0)
    k_emb, k_tok, k_len, k_w, k_b = jax.random.split(key, 5)

    VOCAB = 20
    B, S = 4, 8

    # Deterministic synthetic parameters (not a checkpoint load).
    emb_table = jax.random.normal(k_emb, (VOCAB, EMB_SIZE), dtype=jnp.float32) * 0.1
    w = jax.random.normal(k_w, (EMB_SIZE, 1), dtype=jnp.float32) * 0.1
    b = jax.random.normal(k_b, (1,), dtype=jnp.float32) * 0.1

    x_tokens = jax.random.randint(k_tok, (B, S), 0, VOCAB, dtype=jnp.int32)
    lengths = jax.random.randint(k_len, (B,), 1, S + 1, dtype=jnp.int32)

    fwd = jax.jit(module1_forward)
    out = jax.block_until_ready(fwd(x_tokens, lengths, emb_table, w, b))

    # Pure-JAX reference of the same semantics (gather -> sum/len -> linear).
    embX_ref = jnp.take(emb_table, x_tokens, axis=0)
    t_ref = jnp.sum(embX_ref, axis=1) / lengths.astype(jnp.float32).reshape(-1, 1)
    pred_ref = t_ref @ w + b.reshape(1, 1)

    assert out.shape == (B, 1)
    # Folding w into the table reorders the f32 contraction; tolerance covers the
    # resulting ~1 ulp-level differences (reciprocal is exact, approx=False).
    assert jnp.allclose(out, pred_ref, atol=1e-4, rtol=1e-4), (out, pred_ref)

    print("KERNEL_OK")
</pallas_src>

<mosaic_0001>
module attributes {stable_mosaic.version = 11 : i64} {
  func.func @pooled_score_kernel(%arg0: i32, %arg1: memref<8x128xi32, #tpu.memory_space<vmem>>, %arg2: memref<1x128xf32, #tpu.memory_space<vmem>>, %arg3: memref<24x1xf32, #tpu.memory_space<vmem>>, %arg4: memref<1x1xf32, #tpu.memory_space<smem>>, %arg5: memref<1x128xf32, #tpu.memory_space<vmem>>) attributes {dimension_semantics = [#tpu.dimension_semantics<parallel>], iteration_bounds = array<i64: 1>, scalar_prefetch = 0 : i64, scratch_operands = 0 : i64, tpu.core_type = #tpu.core_type<tc>, window_params = [{transform_indices = @transform_0, window_bounds = array<i64: 8, 128>}, {transform_indices = @transform_1, window_bounds = array<i64: 1, 128>}, {pipeline_mode = #tpu.pipeline_mode<synchronous>, transform_indices = @transform_2, window_bounds = array<i64: 24, 1>}, {transform_indices = @transform_3, window_bounds = array<i64: 1, 1>}, {transform_indices = @transform_4, window_bounds = array<i64: 1, 128>}]} {
    %0 = tpu.iota {dimensions = array<i32: 0>} : vector<24x128xi32>
    %cst = arith.constant 0.000000e+00 : f32
    %1 = vector.broadcast %cst : f32 to vector<24x128xf32>
    %c0_i32 = arith.constant 0 : i32
    %2 = arith.index_cast %c0_i32 : i32 to index
    %c0 = arith.constant 0 : index
    %3 = vector.load %arg1[%2, %c0] : memref<8x128xi32, #tpu.memory_space<vmem>>, vector<1x128xi32>
    %4 = vector.broadcast %3 : vector<1x128xi32> to vector<24x128xi32>
    %5 = arith.cmpi eq, %4, %0 : vector<24x128xi32>
    %cst_0 = arith.constant 1.000000e+00 : f32
    %cst_1 = arith.constant 0.000000e+00 : f32
    %6 = vector.broadcast %cst_0 : f32 to vector<24x128xf32>
    %7 = vector.broadcast %cst_1 : f32 to vector<24x128xf32>
    %8 = arith.select %5, %6, %7 : vector<24x128xi1>, vector<24x128xf32>
    %9 = arith.addf %1, %8 : vector<24x128xf32>
    %c1_i32 = arith.constant 1 : i32
    %10 = arith.index_cast %c1_i32 : i32 to index
    %c0_2 = arith.constant 0 : index
    %11 = vector.load %arg1[%10, %c0_2] : memref<8x128xi32, #tpu.memory_space<vmem>>, vector<1x128xi32>
    %12 = vector.broadcast %11 : vector<1x128xi32> to vector<24x128xi32>
    %13 = arith.cmpi eq, %12, %0 : vector<24x128xi32>
    %cst_3 = arith.constant 1.000000e+00 : f32
    %cst_4 = arith.constant 0.000000e+00 : f32
    %14 = vector.broadcast %cst_3 : f32 to vector<24x128xf32>
    %15 = vector.broadcast %cst_4 : f32 to vector<24x128xf32>
    %16 = arith.select %13, %14, %15 : vector<24x128xi1>, vector<24x128xf32>
    %17 = arith.addf %9, %16 : vector<24x128xf32>
    %c2_i32 = arith.constant 2 : i32
    %18 = arith.index_cast %c2_i32 : i32 to index
    %c0_5 = arith.constant 0 : index
    %19 = vector.load %arg1[%18, %c0_5] : memref<8x128xi32, #tpu.memory_space<vmem>>, vector<1x128xi32>
    %20 = vector.broadcast %19 : vector<1x128xi32> to vector<24x128xi32>
    %21 = arith.cmpi eq, %20, %0 : vector<24x128xi32>
    %cst_6 = arith.constant 1.000000e+00 : f32
    %cst_7 = arith.constant 0.000000e+00 : f32
    %22 = vector.broadcast %cst_6 : f32 to vector<24x128xf32>
    %23 = vector.broadcast %cst_7 : f32 to vector<24x128xf32>
    %24 = arith.select %21, %22, %23 : vector<24x128xi1>, vector<24x128xf32>
    %25 = arith.addf %17, %24 : vector<24x128xf32>
    %c3_i32 = arith.constant 3 : i32
    %26 = arith.index_cast %c3_i32 : i32 to index
    %c0_8 = arith.constant 0 : index
    %27 = vector.load %arg1[%26, %c0_8] : memref<8x128xi32, #tpu.memory_space<vmem>>, vector<1x128xi32>
    %28 = vector.broadcast %27 : vector<1x128xi32> to vector<24x128xi32>
    %29 = arith.cmpi eq, %28, %0 : vector<24x128xi32>
    %cst_9 = arith.constant 1.000000e+00 : f32
    %cst_10 = arith.constant 0.000000e+00 : f32
    %30 = vector.broadcast %cst_9 : f32 to vector<24x128xf32>
    %31 = vector.broadcast %cst_10 : f32 to vector<24x128xf32>
    %32 = arith.select %29, %30, %31 : vector<24x128xi1>, vector<24x128xf32>
    %33 = arith.addf %25, %32 : vector<24x128xf32>
    %c4_i32 = arith.constant 4 : i32
    %34 = arith.index_cast %c4_i32 : i32 to index
    %c0_11 = arith.constant 0 : index
    %35 = vector.load %arg1[%34, %c0_11] : memref<8x128xi32, #tpu.memory_space<vmem>>, vector<1x128xi32>
    %36 = vector.broadcast %35 : vector<1x128xi32> to vector<24x128xi32>
    %37 = arith.cmpi eq, %36, %0 : vector<24x128xi32>
    %cst_12 = arith.constant 1.000000e+00 : f32
    %cst_13 = arith.constant 0.000000e+00 : f32
    %38 = vector.broadcast %cst_12 : f32 to vector<24x128xf32>
    %39 = vector.broadcast %cst_13 : f32 to vector<24x128xf32>
    %40 = arith.select %37, %38, %39 : vector<24x128xi1>, vector<24x128xf32>
    %41 = arith.addf %33, %40 : vector<24x128xf32>
    %c5_i32 = arith.constant 5 : i32
    %42 = arith.index_cast %c5_i32 : i32 to index
    %c0_14 = arith.constant 0 : index
    %43 = vector.load %arg1[%42, %c0_14] : memref<8x128xi32, #tpu.memory_space<vmem>>, vector<1x128xi32>
    %44 = vector.broadcast %43 : vector<1x128xi32> to vector<24x128xi32>
    %45 = arith.cmpi eq, %44, %0 : vector<24x128xi32>
    %cst_15 = arith.constant 1.000000e+00 : f32
    %cst_16 = arith.constant 0.000000e+00 : f32
    %46 = vector.broadcast %cst_15 : f32 to vector<24x128xf32>
    %47 = vector.broadcast %cst_16 : f32 to vector<24x128xf32>
    %48 = arith.select %45, %46, %47 : vector<24x128xi1>, vector<24x128xf32>
    %49 = arith.addf %41, %48 : vector<24x128xf32>
    %c6_i32 = arith.constant 6 : i32
    %50 = arith.index_cast %c6_i32 : i32 to index
    %c0_17 = arith.constant 0 : index
    %51 = vector.load %arg1[%50, %c0_17] : memref<8x128xi32, #tpu.memory_space<vmem>>, vector<1x128xi32>
    %52 = vector.broadcast %51 : vector<1x128xi32> to vector<24x128xi32>
    %53 = arith.cmpi eq, %52, %0 : vector<24x128xi32>
    %cst_18 = arith.constant 1.000000e+00 : f32
    %cst_19 = arith.constant 0.000000e+00 : f32
    %54 = vector.broadcast %cst_18 : f32 to vector<24x128xf32>
    %55 = vector.broadcast %cst_19 : f32 to vector<24x128xf32>
    %56 = arith.select %53, %54, %55 : vector<24x128xi1>, vector<24x128xf32>
    %57 = arith.addf %49, %56 : vector<24x128xf32>
    %c7_i32 = arith.constant 7 : i32
    %58 = arith.index_cast %c7_i32 : i32 to index
    %c0_20 = arith.constant 0 : index
    %59 = vector.load %arg1[%58, %c0_20] : memref<8x128xi32, #tpu.memory_space<vmem>>, vector<1x128xi32>
    %60 = vector.broadcast %59 : vector<1x128xi32> to vector<24x128xi32>
    %61 = arith.cmpi eq, %60, %0 : vector<24x128xi32>
    %cst_21 = arith.constant 1.000000e+00 : f32
    %cst_22 = arith.constant 0.000000e+00 : f32
    %62 = vector.broadcast %cst_21 : f32 to vector<24x128xf32>
    %63 = vector.broadcast %cst_22 : f32 to vector<24x128xf32>
    %64 = arith.select %61, %62, %63 : vector<24x128xi1>, vector<24x128xf32>
    %65 = arith.addf %57, %64 : vector<24x128xf32>
    %c8_i32 = arith.constant 8 : i32
    %c0_23 = arith.constant 0 : index
    %c0_24 = arith.constant 0 : index
    %66 = vector.load %arg3[%c0_23, %c0_24] : memref<24x1xf32, #tpu.memory_space<vmem>>, vector<24x1xf32>
    %67 = vector.broadcast %66 : vector<24x1xf32> to vector<24x128xf32>
    %68 = arith.mulf %65, %67 : vector<24x128xf32>
    %cst_25 = arith.constant dense<0.000000e+00> : vector<128xf32>
    %69 = vector.multi_reduction <add>, %68, %cst_25 [0] : vector<24x128xf32> to vector<128xf32>
    %70 = vector.shape_cast %69 : vector<128xf32> to vector<1x128xf32>
    %c0_26 = arith.constant 0 : index
    %c0_27 = arith.constant 0 : index
    %71 = vector.load %arg2[%c0_26, %c0_27] : memref<1x128xf32, #tpu.memory_space<vmem>>, vector<1x128xf32>
    %72 = tpu.reciprocal %71 : vector<1x128xf32> -> vector<1x128xf32>
    %73 = arith.mulf %70, %72 : vector<1x128xf32>
    %c0_28 = arith.constant 0 : index
    %c0_29 = arith.constant 0 : index
    %74 = memref.load %arg4[%c0_28, %c0_29] : memref<1x1xf32, #tpu.memory_space<smem>>
    %75 = vector.broadcast %74 : f32 to vector<1x128xf32>
    %76 = arith.addf %73, %75 : vector<1x128xf32>
    %c0_30 = arith.constant 0 : index
    %c0_31 = arith.constant 0 : index
    %77 = vector.load %arg5[%c0_30, %c0_31] : memref<1x128xf32, #tpu.memory_space<vmem>>, vector<1x128xf32>
    tpu.vector_store %arg5[%c0_30, %c0_31], %76 {strides = array<i32>} : memref<1x128xf32, #tpu.memory_space<vmem>>, vector<1x128xf32>,
    return
  }
  func.func @transform_0(%arg0: i32) -> (i32, i32) {
    %c0_i32 = arith.constant 0 : i32
    %c0_i32_0 = arith.constant 0 : i32
    return %c0_i32, %arg0 : i32, i32
  }
  func.func @transform_1(%arg0: i32) -> (i32, i32) {
    %c0_i32 = arith.constant 0 : i32
    %c0_i32_0 = arith.constant 0 : i32
    return %c0_i32, %arg0 : i32, i32
  }
  func.func @transform_2(%arg0: i32) -> (i32, i32) {
    %c0_i32 = arith.constant 0 : i32
    %c0_i32_0 = arith.constant 0 : i32
    %c0_i32_1 = arith.constant 0 : i32
    return %c0_i32, %c0_i32_0 : i32, i32
  }
  func.func @transform_3(%arg0: i32) -> (i32, i32) {
    %c0_i32 = arith.constant 0 : i32
    %c0_i32_0 = arith.constant 0 : i32
    %c0_i32_1 = arith.constant 0 : i32
    return %c0_i32, %c0_i32_0 : i32, i32
  }
  func.func @transform_4(%arg0: i32) -> (i32, i32) {
    %c0_i32 = arith.constant 0 : i32
    %c0_i32_0 = arith.constant 0 : i32
    return %c0_i32, %arg0 : i32, i32
  }
}

</mosaic_0001>

<llo_original>
// kernel: module1_forward.1
$region0: #{module1_forward.1}
  #allocation0 [shape = 'u32[]', space=smem, size = 0x4, offset = 0x4, fixed_abs, tag = 'smem constant byte address 0x4 - core index']
  #allocation1 [shape = 'u32[72,128]{1,0:T(1,128)}', space=vmem, size = 0x9000, scoped, tag = 'internal scratch']
  #allocation2 [shape = 'f32[1,1]{1,0:T(1,128)S(6)}', space=smem, size = 0x200, scoped, tag = 'scoped memory for module1_forward.1']
  %s0 = inlined_call_operand.vmem [shape: s32[8,128], index: 0, kind: input, shape index: {}]
  %s1 = inlined_call_operand.vmem [shape: f32[1,128], index: 1, kind: input, shape index: {}]
  %s2 = inlined_call_operand.vmem [shape: f32[24,1], index: 2, kind: input, shape index: {}]
  %s3 = inlined_call_operand.<no memory space> [shape: f32[1,1], index: 3, kind: input, shape index: {}]
  %s4 = inlined_call_operand.vmem [shape: f32[1,128], index: 4, kind: output, shape index: {}]
  %s5 = sld [smem:[#allocation0]]
  $region26: #{module1_forward.1} parent=0
    _
  %s7 = ssub.s32 1, %s5
  %s8 = scalar_select 0, %s7, %s5
  %9 = sst [smem:[#allocation2]] %s3
  // Predicated region
  $region2: #{module1_forward.1} parent=0 // pred_check
    _
  $region3: #{module1_forward.1} parent=0 // pred_check_branch
    %11 = sbr.rel (0) target = $region5
  $region4: #{module1_forward.1} parent=0 // pred_region
    _
  $region5: #{module1_forward.1} parent=0 // pred_fallthru
    _
  // Predicated region
  $region6: #{module1_forward.1} parent=0 // pred_check
    _
  $region7: #{module1_forward.1} parent=0 // pred_check_branch
    %13 = sbr.rel (0) target = $region9
  $region8: #{module1_forward.1} parent=0 // pred_region
    _
  $region9: #{module1_forward.1} parent=0 // pred_fallthru
    _
  // Predicated region
  $region10: #{module1_forward.1} parent=0 // pred_check
    _
  $region11: #{module1_forward.1} parent=0 // pred_check_branch
    %15 = sbr.rel (0) target = $region13
  $region12: #{module1_forward.1} parent=0 // pred_region
    _
  $region13: #{module1_forward.1} parent=0 // pred_fallthru
    _
  // Predicated region
  $region14: #{module1_forward.1} parent=0 // pred_check
    _
  $region15: #{module1_forward.1} parent=0 // pred_check_branch
    %17 = sbr.rel (0) target = $region17
  $region16: #{module1_forward.1} parent=0 // pred_region
    _
  $region17: #{module1_forward.1} parent=0 // pred_fallthru
    _
  %v18 = vlaneseq
  %v19 = vshrl.u32 %v18, 7
  %v20 = vadd.s32 %v19, 8
  %v21 = vadd.s32 %v19, 16
  %v22 = vld [vmem:[%s0] sm:$0x1]
  %v23 = vperm.slane %v22, 0
  %vm24 = vcmp.eq.s32.totalorder %v23, %v19
  %vm25 = vcmp.eq.s32.totalorder %v23, %v20
  %vm26 = vcmp.eq.s32.totalorder %v23, %v21
  %v27 = vsel %vm24, 1.0, 0.0
  %v28 = vsel %vm25, 1.0, 0.0
  %v29 = vsel %vm26, 1.0, 0.0
  %v30 = vadd.f32 %v27, 0.0
  %v31 = vadd.f32 %v28, 0.0
  %v32 = vadd.f32 %v29, 0.0
  %v33 = vld [vmem:[%s0 + $0x1] sm:$0x1]
  %v34 = vperm.slane %v33, 0
  %vm35 = vcmp.eq.s32.totalorder %v34, %v19
  %vm36 = vcmp.eq.s32.totalorder %v34, %v20
  %vm37 = vcmp.eq.s32.totalorder %v34, %v21
  %v38 = vsel %vm35, 1.0, 0.0
  %v39 = vsel %vm36, 1.0, 0.0
  %v40 = vsel %vm37, 1.0, 0.0
  %v41 = vadd.f32 %v30, %v38
  %v42 = vadd.f32 %v31, %v39
  %v43 = vadd.f32 %v32, %v40
  %v44 = vld [vmem:[%s0 + $0x2] sm:$0x1]
  %v45 = vperm.slane %v44, 0
  %vm46 = vcmp.eq.s32.totalorder %v45, %v19
  %vm47 = vcmp.eq.s32.totalorder %v45, %v20
  %vm48 = vcmp.eq.s32.totalorder %v45, %v21
  %v49 = vsel %vm46, 1.0, 0.0
  %v50 = vsel %vm47, 1.0, 0.0
  %v51 = vsel %vm48, 1.0, 0.0
  %v52 = vadd.f32 %v41, %v49
  %v53 = vadd.f32 %v42, %v50
  %v54 = vadd.f32 %v43, %v51
  %v55 = vld [vmem:[%s0 + $0x3] sm:$0x1]
  %v56 = vperm.slane %v55, 0
  %vm57 = vcmp.eq.s32.totalorder %v56, %v19
  %vm58 = vcmp.eq.s32.totalorder %v56, %v20
  %vm59 = vcmp.eq.s32.totalorder %v56, %v21
  %v60 = vsel %vm57, 1.0, 0.0
  %v61 = vsel %vm58, 1.0, 0.0
  %v62 = vsel %vm59, 1.0, 0.0
  %v63 = vadd.f32 %v52, %v60
  %v64 = vadd.f32 %v53, %v61
  %v65 = vadd.f32 %v54, %v62
  %v66 = vld [vmem:[%s0 + $0x4] sm:$0x1]
  %v67 = vperm.slane %v66, 0
  %vm68 = vcmp.eq.s32.totalorder %v67, %v19
  %vm69 = vcmp.eq.s32.totalorder %v67, %v20
  %vm70 = vcmp.eq.s32.totalorder %v67, %v21
  %v71 = vsel %vm68, 1.0, 0.0
  %v72 = vsel %vm69, 1.0, 0.0
  %v73 = vsel %vm70, 1.0, 0.0
  %v74 = vadd.f32 %v63, %v71
  %v75 = vadd.f32 %v64, %v72
  %v76 = vadd.f32 %v65, %v73
  %v77 = vld [vmem:[%s0 + $0x5] sm:$0x1]
  %v78 = vperm.slane %v77, 0
  %vm79 = vcmp.eq.s32.totalorder %v78, %v19
  %vm80 = vcmp.eq.s32.totalorder %v78, %v20
  %vm81 = vcmp.eq.s32.totalorder %v78, %v21
  %v82 = vsel %vm79, 1.0, 0.0
  %v83 = vsel %vm80, 1.0, 0.0
  %v84 = vsel %vm81, 1.0, 0.0
  %v85 = vadd.f32 %v74, %v82
  %v86 = vadd.f32 %v75, %v83
  %v87 = vadd.f32 %v76, %v84
  %v88 = vld [vmem:[%s0 + $0x6] sm:$0x1]
  %v89 = vperm.slane %v88, 0
  %vm90 = vcmp.eq.s32.totalorder %v89, %v19
  %vm91 = vcmp.eq.s32.totalorder %v89, %v20
  %vm92 = vcmp.eq.s32.totalorder %v89, %v21
  %v93 = vsel %vm90, 1.0, 0.0
  %v94 = vsel %vm91, 1.0, 0.0
  %v95 = vsel %vm92, 1.0, 0.0
  %v96 = vadd.f32 %v85, %v93
  %v97 = vadd.f32 %v86, %v94
  %v98 = vadd.f32 %v87, %v95
  %v99 = vld [vmem:[%s0 + $0x7] sm:$0x1]
  %v100 = vperm.slane %v99, 0
  %vm101 = vcmp.eq.s32.totalorder %v100, %v19
  %vm102 = vcmp.eq.s32.totalorder %v100, %v20
  %vm103 = vcmp.eq.s32.totalorder %v100, %v21
  %v104 = vsel %vm101, 1.0, 0.0
  %v105 = vsel %vm102, 1.0, 0.0
  %v106 = vsel %vm103, 1.0, 0.0
  %v107 = vadd.f32 %v96, %v104
  %v108 = vadd.f32 %v97, %v105
  %v109 = vadd.f32 %v98, %v106
  %v110 = vld [vmem:[%s2] sm:$0xff]
  %v111 = vld [vmem:[%s2 + $0x8] sm:$0xff]
  %v112 = vld [vmem:[%s2 + $0x10] sm:$0xff]
  %114 = vset.pattern.permute.xlu0 0
  %115 = vperm.xlu0 %114, %v110
  %v116 = vpop.permute.xlu0 %115
  %119 = vset.pattern.permute.xlu0 0
  %120 = vperm.xlu0 %119, %v111
  %v121 = vpop.permute.xlu0 %120
  %124 = vset.pattern.permute.xlu0 0
  %125 = vperm.xlu0 %124, %v112
  %v126 = vpop.permute.xlu0 %125
  %v128 = vmul.f32 %v107, %v116
  %v129 = vmul.f32 %v108, %v121
  %v130 = vmul.f32 %v109, %v126
  %v131 = vadd.f32 %v128, %v129
  %v132 = vadd.f32 %v131, %v130
  %v133 = vrot.slane %v132, 4
  %v134 = vadd.f32 %v132, %v133
  %v135 = vrot.slane %v134, 2
  %v136 = vadd.f32 %v134, %v135
  %v137 = vrot.slane %v136, 1
  %v138 = vadd.f32 %v136, %v137
  %v139 = vld [vmem:[%s1] sm:$0x1]
  %v140 = vrcp.pop %v139
  %v141 = vmul.f32 %v139, %v140
  %v142 = vsub.f32 1.0, %v141
  %v143 = vmul.f32 %v140, %v142
  %v144 = vadd.f32 %v140, %v143
  %vm145 = vweird.f32 %v139
  %vm146 = vweird.f32 %v140
  %vm147 = vmor %vm145, %vm146
  %v148 = vsel %vm147, %v140, %v144
  %v149 = vand.u32 2147483647, %v139
  %vm150 = vcmp.eq.f32.partialorder %v149, 8.507059e+37
  %v151 = vand.u32 %v139, 2147483648
  %v152 = vor.u32 1.1754944e-38, %v151
  %v153 = vsel %vm150, %v152, %v148
  %v154 = vmul.f32 %v138, %v153
  %s155 = sld [smem:[#allocation2]]
  %v156 = vstv %s155
  %v157 = vadd.f32 %v154, %v156
  %158 = vst [vmem:[%s4] sm:$0x1] %v157
  // Predicated region
  $region18: #{module1_forward.1} parent=0 // pred_check
    _
  $region19: #{module1_forward.1} parent=0 // pred_check_branch
    %160 = sbr.rel (0) target = $region21
  $region20: #{module1_forward.1} parent=0 // pred_region
    _
  $region21: #{module1_forward.1} parent=0 // pred_fallthru
    _
  // Predicated region
  $region22: #{module1_forward.1} parent=0 // pred_check
    _
  $region23: #{module1_forward.1} parent=0 // pred_check_branch
    %162 = sbr.rel (0) target = $region25
  $region24: #{module1_forward.1} parent=0 // pred_region
    _
  $region25: #{module1_forward.1} parent=0 // pred_fallthru
    _

</llo_original>
